<compile_context>
chip_gen: v5e
topology: v5e:2x2
jax: 0.10.0
libtpu: 0.0.40
codegen_flags: <defaults>
</compile_context>

<pallas_src>
import jax
import jax.numpy as jnp
from jax.experimental import pallas as pl
from jax.experimental.pallas import tpu as pltpu

EPS = 1e-12  # F.normalize default eps


def _vq_kernel(x_ref, w_in_ref, b_in_ref, cbn_ref, half_l2c_ref, cbt_ref,
               w_out_ref, b_out_ref,
               out_ref, proj_ref, idx_ref, sqerr_ref):
    # Per-grid-step shapes (batch axis squeezed):
    #   x:        (H, TT)  input slab, f32 (cast to MXU dtype in-kernel)
    #   w_in:     (D, H)   in_proj Conv1d(k=1) weight, compute dtype (bf16/f32)
    #   b_in:     (D, 1)   f32
    #   cbn:      (N, D)   l2-normalized codebook, f32 (kept f32 for argmax parity)
    #   half_l2c: (N, 1)   0.5 * ||cbn||^2 per code, f32
    #   cbt:      (D, N)   raw codebook transposed, compute dtype (gather operand)
    #   w_out:    (H, D)   out_proj Conv1d(k=1) weight, compute dtype
    #   b_out:    (H, 1)   f32
    cd = w_in_ref.dtype                       # MXU operand dtype (bf16 or f32)
    x = x_ref[...].astype(cd)

    # --- in_proj (Conv1d kernel_size=1 == per-timestep matmul), f32 accumulate ---
    proj = jnp.dot(w_in_ref[...], x, preferred_element_type=jnp.float32) + b_in_ref[...]
    proj_ref[...] = proj                                              # (D, TT) f32

    # --- decode_latents: l2-normalize encodings along the channel axis (EUP rsqrt) ---
    sumsq = jnp.sum(proj * proj, axis=0, keepdims=True)               # (1, TT)
    enc_n = proj * jax.lax.rsqrt(jnp.maximum(sumsq, EPS * EPS))       # == x / max(||x||, eps)

    # cosine-similarity score vs. normalized codebook: (N, TT) — kept f32 for
    # exact argmax parity with the torch reference.
    cross = jnp.dot(cbn_ref[...], enc_n, preferred_element_type=jnp.float32)
    # reference dist = -(||e_n||^2 - 2 e_n.c_n) + ||c_n||^2 ; per-timestep
    # constant dropped and positive rescale by 0.5 applied -> same argmax.
    score = cross + half_l2c_ref[...]

    # argmax over codes (sublane axis), first index on ties (== torch.max)
    n_codes = score.shape[0]
    row = jax.lax.broadcasted_iota(jnp.int32, score.shape, 0)         # (N, TT)
    max_val = jnp.max(score, axis=0, keepdims=True)                   # (1, TT)
    idx = jnp.min(jnp.where(score == max_val, row, n_codes),
                  axis=0, keepdims=True)                              # (1, TT)
    idx_ref[...] = idx

    # gather UN-normalized codebook rows via one-hot matmul (MXU): (D, TT)
    # 0/1 is exact in bf16 -> build the one-hot directly in the MXU dtype.
    onehot = (row == idx).astype(cbt_ref.dtype)                       # (N, TT)
    quant = jnp.dot(cbt_ref[...], onehot, preferred_element_type=jnp.float32)

    # per-timestep partial squared error (finalized to the MSE in the wrapper)
    diff = proj - quant
    sqerr_ref[...] = jnp.sum(diff * diff, axis=0, keepdims=True)      # (1, TT)

    # straight-through estimator: forward value of proj + (quant-proj).detach() == quant
    # --- out_proj (Conv1d kernel_size=1) ---
    out_ref[...] = jnp.dot(w_out_ref[...], quant.astype(cd),
                           preferred_element_type=jnp.float32) + b_out_ref[...]


def _tpu_tiling_defaults():
    """(tile_t, vmem_limit_bytes) chosen per TPU generation."""
    kind = ""
    try:
        kind = jax.devices()[0].device_kind.lower()
    except Exception:
        pass
    if "v6" in kind:
        # v6e: 128 MiB VMEM — bigger tile amortizes the ~0.35 us per-step overhead.
        return 1024, 64 * 1024 * 1024
    if "v7" in kind:
        # v7x: only 64 MiB VMEM per TC — keep moderate tiles, default scoped limit.
        return 512, None
    # v5e (16 MiB default scoped VMEM) and anything else: keep the 512 tile for
    # DMA efficiency but raise the scoped limit to cover tiles + (N,TT) temporaries.
    return 512, 32 * 1024 * 1024


def dac_vector_quantize(hidden_state, in_proj_w, in_proj_b, codebook,
                        out_proj_w, out_proj_b, *,
                        tile_t=None, vmem_limit_bytes=None,
                        compute_dtype=jnp.bfloat16):
    """Forward of DacVectorQuantize.

    hidden_state: (B, H, T) float32 (PyTorch NCW)
    in_proj_w:    (D, H)   Conv1d(H, D, 1) weight with the k=1 axis squeezed
    in_proj_b:    (D,)
    codebook:     (N, D)
    out_proj_w:   (H, D)   Conv1d(D, H, 1) weight with the k=1 axis squeezed
    out_proj_b:   (H,)
    compute_dtype: MXU operand dtype for the proj/gather matmuls (bf16 default,
                   pass jnp.float32 for bit-level parity with the reference).
    Returns (quantized_representation, commitment_loss, codebook_loss,
             audio_codes, projected_latents) like the PyTorch module.
    """
    B, H, T = hidden_state.shape
    N, D = codebook.shape
    f32 = jnp.float32

    auto_tile, auto_vmem = _tpu_tiling_defaults()
    if tile_t is None:
        tile_t = auto_tile
    if vmem_limit_bytes is None:
        vmem_limit_bytes = auto_vmem

    # --- tail handling: lane-aligned tile + padding (no "largest divisor" loop) ---
    tile_t = int(max(1, min(tile_t, T)))
    if T > tile_t:
        tile_t = max(128, (tile_t // 128) * 128)     # keep tile a multiple of 128
        t_pad = int(pl.cdiv(T, tile_t)) * tile_t
    else:
        t_pad = T                                     # single full-extent tile
    num_t = t_pad // tile_t
    x_in = hidden_state.astype(f32)
    if t_pad != T:
        x_in = jnp.pad(x_in, ((0, 0), (0, 0), (0, t_pad - T)))

    # --- one-time (tiny) codebook / weight prep, hoisted out of the per-tile body ---
    cb = codebook.astype(f32)
    cb_norm = jnp.sqrt(jnp.sum(cb * cb, axis=1, keepdims=True))
    cb_n = cb / jnp.maximum(cb_norm, EPS)                              # (N, D) f32
    half_l2c = 0.5 * jnp.sum(cb_n * cb_n, axis=1, keepdims=True)       # (N, 1) f32
    cb_t = cb.T.astype(compute_dtype)                                  # (D, N)
    w_in = in_proj_w.astype(compute_dtype)                             # (D, H)
    w_out = out_proj_w.astype(compute_dtype)                           # (H, D)
    b_in = in_proj_b.reshape(D, 1).astype(f32)
    b_out = out_proj_b.reshape(H, 1).astype(f32)

    grid = (B, num_t)

    def act_spec(c):  # (1, c, tile_t) block over a (B, c, t_pad) array, batch squeezed
        return pl.BlockSpec((None, c, tile_t), lambda b, t: (b, 0, t))

    def full(shape):  # whole-array resident block (weights / codebook)
        return pl.BlockSpec(shape, lambda b, t: (0,) * len(shape))

    out, proj, codes, sqerr = pl.pallas_call(
        _vq_kernel,
        grid=grid,
        out_shape=(
            jax.ShapeDtypeStruct((B, H, t_pad), jnp.float32),   # out_proj(quantized)
            jax.ShapeDtypeStruct((B, D, t_pad), jnp.float32),   # projected_latents
            jax.ShapeDtypeStruct((B, 1, t_pad), jnp.int32),     # audio_codes (lane-dense)
            jax.ShapeDtypeStruct((B, 1, t_pad), jnp.float32),   # per-timestep sq-err partials
        ),
        in_specs=[
            act_spec(H),          # hidden_state tile (H, tile_t)
            full((D, H)),         # in_proj weight
            full((D, 1)),         # in_proj bias
            full((N, D)),         # normalized codebook (f32, score matmul)
            full((N, 1)),         # 0.5 * ||codebook_n||^2
            full((D, N)),         # raw codebook, transposed (gather)
            full((H, D)),         # out_proj weight
            full((H, 1)),         # out_proj bias
        ],
        out_specs=(
            act_spec(H),
            act_spec(D),
            act_spec(1),
            act_spec(1),
        ),
        compiler_params=pltpu.CompilerParams(
            dimension_semantics=("parallel", "parallel"),
            vmem_limit_bytes=vmem_limit_bytes),
    )(x_in, w_in, b_in, cb_n, half_l2c, cb_t, w_out, b_out)

    # finalize: slice off padding, reduce the partial squared errors to the MSE.
    loss = jnp.sum(sqerr[:, 0, :T]) / jnp.float32(B * T * D)
    if t_pad != T:
        out = out[:, :, :T]
        proj = proj[:, :, :T]
    audio_codes = codes[:, 0, :T]        # (B, T) int32 (torch returns int64)
    # commitment_loss and codebook_loss have identical forward values.
    return out, loss, loss, audio_codes, proj


def _reference(hidden_state, in_w, in_b, codebook, out_w, out_b):
    """Pure-JAX f32 reference mirroring the PyTorch forward (verification only)."""
    B, H, T = hidden_state.shape
    proj = jnp.einsum('bht,dh->bdt', hidden_state, in_w) + in_b[None, :, None]
    enc = proj.transpose(0, 2, 1).reshape(B * T, -1)
    enc_n = enc / jnp.maximum(jnp.linalg.norm(enc, axis=1, keepdims=True), EPS)
    cb_n = codebook / jnp.maximum(jnp.linalg.norm(codebook, axis=1, keepdims=True), EPS)
    l2 = jnp.sum(enc_n ** 2, axis=1, keepdims=True)
    dist = -(l2 - 2.0 * enc_n @ cb_n.T) + jnp.sum(cb_n ** 2, axis=1, keepdims=True).T
    indices = jnp.argmax(dist, axis=1).reshape(B, T)
    quant = codebook[indices].transpose(0, 2, 1)                       # (B, D, T)
    loss = jnp.mean((proj - quant) ** 2)
    out = jnp.einsum('bdt,hd->bht', quant, out_w) + out_b[None, :, None]
    return out, loss, loss, indices, proj


if __name__ == "__main__":
    # small shapes consistent with the module
    batch, hidden_size, time_steps = 2, 32, 16
    codebook_dim, codebook_size = 8, 16

    key = jax.random.PRNGKey(0)
    k1, k2, k3, k4, k5, k6 = jax.random.split(key, 6)

    hidden_state = jax.random.normal(k1, (batch, hidden_size, time_steps), jnp.float32)
    # Conv1d(H, D, 1) weight: PyTorch shape (D, H, 1) squeezed to (D, H)
    in_proj_w = jax.random.normal(k2, (codebook_dim, hidden_size), jnp.float32) * 0.1
    in_proj_b = jax.random.normal(k3, (codebook_dim,), jnp.float32) * 0.1
    codebook = jax.random.normal(k4, (codebook_size, codebook_dim), jnp.float32)
    # Conv1d(D, H, 1) weight: PyTorch shape (H, D, 1) squeezed to (H, D)
    out_proj_w = jax.random.normal(k5, (hidden_size, codebook_dim), jnp.float32) * 0.1
    out_proj_b = jax.random.normal(k6, (hidden_size,), jnp.float32) * 0.1

    rq, rcl, rcbl, rcodes, rproj = _reference(hidden_state, in_proj_w, in_proj_b,
                                              codebook, out_proj_w, out_proj_b)

    # 1) exact-parity path (all-f32 MXU operands) -> strict checks vs. the reference
    q, cl, cbl, codes, proj_lat = jax.block_until_ready(
        dac_vector_quantize(hidden_state, in_proj_w, in_proj_b, codebook,
                            out_proj_w, out_proj_b, compute_dtype=jnp.float32))
    assert q.shape == (batch, hidden_size, time_steps)
    assert proj_lat.shape == (batch, codebook_dim, time_steps)
    assert codes.shape == (batch, time_steps)
    assert jnp.allclose(q, rq, atol=1e-4), "quantized mismatch (f32 path)"
    assert jnp.allclose(proj_lat, rproj, atol=1e-4), "projected latents mismatch (f32 path)"
    assert jnp.array_equal(codes, rcodes), "codes mismatch (f32 path)"
    assert jnp.allclose(cl, rcl, atol=1e-5), "loss mismatch (f32 path)"

    # 2) default performance path (bf16 MXU operands, f32 accumulate)
    q16, cl16, cbl16, codes16, proj16 = jax.block_until_ready(
        dac_vector_quantize(hidden_state, in_proj_w, in_proj_b, codebook,
                            out_proj_w, out_proj_b))
    assert q16.shape == (batch, hidden_size, time_steps)
    assert proj16.shape == (batch, codebook_dim, time_steps)
    assert codes16.shape == (batch, time_steps)
    assert bool(jnp.all(jnp.isfinite(q16))) and bool(jnp.isfinite(cl16))
    # projected latents don't depend on the code choice -> compare loosely vs f32 ref
    assert jnp.allclose(proj16, rproj, atol=3e-2), "projected latents mismatch (bf16 path)"

    print("KERNEL_OK")
</pallas_src>

<mosaic_0001>
module attributes {stable_mosaic.version = 11 : i64} {
  func.func @_vq_kernel(%arg0: i32, %arg1: i32, %arg2: memref<1x32x16xf32, #tpu.memory_space<vmem>>, %arg3: memref<8x32xf32, #tpu.memory_space<vmem>>, %arg4: memref<8x1xf32, #tpu.memory_space<vmem>>, %arg5: memref<16x8xf32, #tpu.memory_space<vmem>>, %arg6: memref<16x1xf32, #tpu.memory_space<vmem>>, %arg7: memref<8x16xf32, #tpu.memory_space<vmem>>, %arg8: memref<32x8xf32, #tpu.memory_space<vmem>>, %arg9: memref<32x1xf32, #tpu.memory_space<vmem>>, %arg10: memref<1x32x16xf32, #tpu.memory_space<vmem>>, %arg11: memref<1x8x16xf32, #tpu.memory_space<vmem>>, %arg12: memref<1x1x16xi32, #tpu.memory_space<vmem>>, %arg13: memref<1x1x16xf32, #tpu.memory_space<vmem>>) attributes {dimension_semantics = [#tpu.dimension_semantics<parallel>, #tpu.dimension_semantics<parallel>], iteration_bounds = array<i64: 2, 1>, scalar_prefetch = 0 : i64, scratch_operands = 0 : i64, tpu.core_type = #tpu.core_type<tc>, window_params = [{transform_indices = @transform_0, window_bounds = array<i64: 1, 32, 16>}, {pipeline_mode = #tpu.pipeline_mode<synchronous>, transform_indices = @transform_1, window_bounds = array<i64: 8, 32>}, {pipeline_mode = #tpu.pipeline_mode<synchronous>, transform_indices = @transform_2, window_bounds = array<i64: 8, 1>}, {pipeline_mode = #tpu.pipeline_mode<synchronous>, transform_indices = @transform_3, window_bounds = array<i64: 16, 8>}, {pipeline_mode = #tpu.pipeline_mode<synchronous>, transform_indices = @transform_4, window_bounds = array<i64: 16, 1>}, {pipeline_mode = #tpu.pipeline_mode<synchronous>, transform_indices = @transform_5, window_bounds = array<i64: 8, 16>}, {pipeline_mode = #tpu.pipeline_mode<synchronous>, transform_indices = @transform_6, window_bounds = array<i64: 32, 8>}, {pipeline_mode = #tpu.pipeline_mode<synchronous>, transform_indices = @transform_7, window_bounds = array<i64: 32, 1>}, {transform_indices = @transform_8, window_bounds = array<i64: 1, 32, 16>}, {transform_indices = @transform_9, window_bounds = array<i64: 1, 8, 16>}, {transform_indices = @transform_10, window_bounds = array<i64: 1, 1, 16>}, {transform_indices = @transform_11, window_bounds = array<i64: 1, 1, 16>}]} {
    %c0 = arith.constant 0 : index
    %c0_0 = arith.constant 0 : index
    %c0_1 = arith.constant 0 : index
    %0 = vector.load %arg2[%c0, %c0_0, %c0_1] : memref<1x32x16xf32, #tpu.memory_space<vmem>>, vector<1x32x16xf32>
    %1 = vector.shape_cast %0 : vector<1x32x16xf32> to vector<32x16xf32>
    %c0_2 = arith.constant 0 : index
    %c0_3 = arith.constant 0 : index
    %2 = vector.load %arg3[%c0_2, %c0_3] : memref<8x32xf32, #tpu.memory_space<vmem>>, vector<8x32xf32>
    %cst = arith.constant dense<0.000000e+00> : vector<8x16xf32>
    %3 = tpu.matmul %2, %1, %cst {dimension_numbers = #tpu.dot_dimension_numbers<[1], [0], [0], [1], [0, 0, 1, 1], [], []>} : vector<8x32xf32>, vector<32x16xf32>, vector<8x16xf32> -> vector<8x16xf32>
    %c0_4 = arith.constant 0 : index
    %c0_5 = arith.constant 0 : index
    %4 = vector.load %arg4[%c0_4, %c0_5] : memref<8x1xf32, #tpu.memory_space<vmem>>, vector<8x1xf32>
    %5 = vector.broadcast %4 : vector<8x1xf32> to vector<8x16xf32>
    %6 = arith.addf %3, %5 : vector<8x16xf32>
    %c0_6 = arith.constant 0 : index
    %c0_7 = arith.constant 0 : index
    %c0_8 = arith.constant 0 : index
    %7 = vector.load %arg11[%c0_6, %c0_7, %c0_8] : memref<1x8x16xf32, #tpu.memory_space<vmem>>, vector<1x8x16xf32>
    %8 = vector.shape_cast %7 : vector<1x8x16xf32> to vector<8x16xf32>
    %9 = vector.shape_cast %6 : vector<8x16xf32> to vector<1x8x16xf32>
    tpu.vector_store %arg11[%c0_6, %c0_7, %c0_8], %9 {strides = array<i32>} : memref<1x8x16xf32, #tpu.memory_space<vmem>>, vector<1x8x16xf32>,
    %10 = arith.mulf %6, %6 : vector<8x16xf32>
    %cst_9 = arith.constant dense<0.000000e+00> : vector<16xf32>
    %11 = vector.multi_reduction <add>, %10, %cst_9 [0] : vector<8x16xf32> to vector<16xf32>
    %12 = vector.shape_cast %11 : vector<16xf32> to vector<1x16xf32>
    %cst_10 = arith.constant 1.000000e-24 : f32
    %13 = vector.broadcast %cst_10 : f32 to vector<1x16xf32>
    %14 = arith.maximumf %12, %13 : vector<1x16xf32>
    %15 = math.rsqrt %14 : vector<1x16xf32>
    %16 = vector.broadcast %15 : vector<1x16xf32> to vector<8x16xf32>
    %17 = arith.mulf %6, %16 : vector<8x16xf32>
    %c0_11 = arith.constant 0 : index
    %c0_12 = arith.constant 0 : index
    %18 = vector.load %arg5[%c0_11, %c0_12] : memref<16x8xf32, #tpu.memory_space<vmem>>, vector<16x8xf32>
    %cst_13 = arith.constant dense<0.000000e+00> : vector<16x16xf32>
    %19 = tpu.matmul %18, %17, %cst_13 {dimension_numbers = #tpu.dot_dimension_numbers<[1], [0], [0], [1], [0, 0, 1, 1], [], []>} : vector<16x8xf32>, vector<8x16xf32>, vector<16x16xf32> -> vector<16x16xf32>
    %c0_14 = arith.constant 0 : index
    %c0_15 = arith.constant 0 : index
    %20 = vector.load %arg6[%c0_14, %c0_15] : memref<16x1xf32, #tpu.memory_space<vmem>>, vector<16x1xf32>
    %21 = vector.broadcast %20 : vector<16x1xf32> to vector<16x16xf32>
    %22 = arith.addf %19, %21 : vector<16x16xf32>
    %23 = tpu.iota {dimensions = array<i32: 0>} : vector<16x16xi32>
    %cst_16 = arith.constant dense<0xFF800000> : vector<16xf32>
    %24 = vector.multi_reduction <maximumf>, %22, %cst_16 [0] : vector<16x16xf32> to vector<16xf32>
    %25 = vector.shape_cast %24 : vector<16xf32> to vector<1x16xf32>
    %26 = vector.broadcast %25 : vector<1x16xf32> to vector<16x16xf32>
    %27 = arith.cmpf oeq, %22, %26 : vector<16x16xf32>
    %c16_i32 = arith.constant 16 : i32
    %28 = vector.broadcast %c16_i32 : i32 to vector<16x16xi32>
    %29 = arith.select %27, %23, %28 : vector<16x16xi1>, vector<16x16xi32>
    %cst_17 = arith.constant dense<2147483647> : vector<16xi32>
    %30 = vector.multi_reduction <minsi>, %29, %cst_17 [0] : vector<16x16xi32> to vector<16xi32>
    %31 = vector.shape_cast %30 : vector<16xi32> to vector<1x16xi32>
    %c0_18 = arith.constant 0 : index
    %c0_19 = arith.constant 0 : index
    %c0_20 = arith.constant 0 : index
    %32 = vector.load %arg12[%c0_18, %c0_19, %c0_20] : memref<1x1x16xi32, #tpu.memory_space<vmem>>, vector<1x1x16xi32>
    %33 = vector.shape_cast %32 : vector<1x1x16xi32> to vector<1x16xi32>
    %34 = vector.shape_cast %31 : vector<1x16xi32> to vector<1x1x16xi32>
    tpu.vector_store %arg12[%c0_18, %c0_19, %c0_20], %34 {strides = array<i32>} : memref<1x1x16xi32, #tpu.memory_space<vmem>>, vector<1x1x16xi32>,
    %35 = vector.broadcast %31 : vector<1x16xi32> to vector<16x16xi32>
    %36 = arith.cmpi eq, %23, %35 : vector<16x16xi32>
    %37 = arith.extui %36 : vector<16x16xi1> to vector<16x16xi32>
    %38 = arith.sitofp %37 : vector<16x16xi32> to vector<16x16xf32>
    %c0_21 = arith.constant 0 : index
    %c0_22 = arith.constant 0 : index
    %39 = vector.load %arg7[%c0_21, %c0_22] : memref<8x16xf32, #tpu.memory_space<vmem>>, vector<8x16xf32>
    %cst_23 = arith.constant dense<0.000000e+00> : vector<8x16xf32>
    %40 = tpu.matmul %39, %38, %cst_23 {dimension_numbers = #tpu.dot_dimension_numbers<[1], [0], [0], [1], [0, 0, 1, 1], [], []>} : vector<8x16xf32>, vector<16x16xf32>, vector<8x16xf32> -> vector<8x16xf32>
    %41 = arith.subf %6, %40 : vector<8x16xf32>
    %42 = arith.mulf %41, %41 : vector<8x16xf32>
    %cst_24 = arith.constant dense<0.000000e+00> : vector<16xf32>
    %43 = vector.multi_reduction <add>, %42, %cst_24 [0] : vector<8x16xf32> to vector<16xf32>
    %44 = vector.shape_cast %43 : vector<16xf32> to vector<1x16xf32>
    %c0_25 = arith.constant 0 : index
    %c0_26 = arith.constant 0 : index
    %c0_27 = arith.constant 0 : index
    %45 = vector.load %arg13[%c0_25, %c0_26, %c0_27] : memref<1x1x16xf32, #tpu.memory_space<vmem>>, vector<1x1x16xf32>
    %46 = vector.shape_cast %45 : vector<1x1x16xf32> to vector<1x16xf32>
    %47 = vector.shape_cast %44 : vector<1x16xf32> to vector<1x1x16xf32>
    tpu.vector_store %arg13[%c0_25, %c0_26, %c0_27], %47 {strides = array<i32>} : memref<1x1x16xf32, #tpu.memory_space<vmem>>, vector<1x1x16xf32>,
    %c0_28 = arith.constant 0 : index
    %c0_29 = arith.constant 0 : index
    %48 = vector.load %arg8[%c0_28, %c0_29] : memref<32x8xf32, #tpu.memory_space<vmem>>, vector<32x8xf32>
    %cst_30 = arith.constant dense<0.000000e+00> : vector<32x16xf32>
    %49 = tpu.matmul %48, %40, %cst_30 {dimension_numbers = #tpu.dot_dimension_numbers<[1], [0], [0], [1], [0, 0, 1, 1], [], []>} : vector<32x8xf32>, vector<8x16xf32>, vector<32x16xf32> -> vector<32x16xf32>
    %c0_31 = arith.constant 0 : index
    %c0_32 = arith.constant 0 : index
    %50 = vector.load %arg9[%c0_31, %c0_32] : memref<32x1xf32, #tpu.memory_space<vmem>>, vector<32x1xf32>
    %51 = vector.broadcast %50 : vector<32x1xf32> to vector<32x16xf32>
    %52 = arith.addf %49, %51 : vector<32x16xf32>
    %c0_33 = arith.constant 0 : index
    %c0_34 = arith.constant 0 : index
    %c0_35 = arith.constant 0 : index
    %53 = vector.load %arg10[%c0_33, %c0_34, %c0_35] : memref<1x32x16xf32, #tpu.memory_space<vmem>>, vector<1x32x16xf32>
    %54 = vector.shape_cast %53 : vector<1x32x16xf32> to vector<32x16xf32>
    %55 = vector.shape_cast %52 : vector<32x16xf32> to vector<1x32x16xf32>
    tpu.vector_store %arg10[%c0_33, %c0_34, %c0_35], %55 {strides = array<i32>} : memref<1x32x16xf32, #tpu.memory_space<vmem>>, vector<1x32x16xf32>,
    return
  }
  func.func @transform_0(%arg0: i32, %arg1: i32) -> (i32, i32, i32) {
    %c0_i32 = arith.constant 0 : i32
    %c0_i32_0 = arith.constant 0 : i32
    return %arg0, %c0_i32, %arg1 : i32, i32, i32
  }
  func.func @transform_1(%arg0: i32, %arg1: i32) -> (i32, i32) {
    %c0_i32 = arith.constant 0 : i32
    %c0_i32_0 = arith.constant 0 : i32
    %c0_i32_1 = arith.constant 0 : i32
    return %c0_i32, %c0_i32_0 : i32, i32
  }
  func.func @transform_2(%arg0: i32, %arg1: i32) -> (i32, i32) {
    %c0_i32 = arith.constant 0 : i32
    %c0_i32_0 = arith.constant 0 : i32
    %c0_i32_1 = arith.constant 0 : i32
    return %c0_i32, %c0_i32_0 : i32, i32
  }
  func.func @transform_3(%arg0: i32, %arg1: i32) -> (i32, i32) {
    %c0_i32 = arith.constant 0 : i32
    %c0_i32_0 = arith.constant 0 : i32
    %c0_i32_1 = arith.constant 0 : i32
    return %c0_i32, %c0_i32_0 : i32, i32
  }
  func.func @transform_4(%arg0: i32, %arg1: i32) -> (i32, i32) {
    %c0_i32 = arith.constant 0 : i32
    %c0_i32_0 = arith.constant 0 : i32
    %c0_i32_1 = arith.constant 0 : i32
    return %c0_i32, %c0_i32_0 : i32, i32
  }
  func.func @transform_5(%arg0: i32, %arg1: i32) -> (i32, i32) {
    %c0_i32 = arith.constant 0 : i32
    %c0_i32_0 = arith.constant 0 : i32
    %c0_i32_1 = arith.constant 0 : i32
    return %c0_i32, %c0_i32_0 : i32, i32
  }
  func.func @transform_6(%arg0: i32, %arg1: i32) -> (i32, i32) {
    %c0_i32 = arith.constant 0 : i32
    %c0_i32_0 = arith.constant 0 : i32
    %c0_i32_1 = arith.constant 0 : i32
    return %c0_i32, %c0_i32_0 : i32, i32
  }
  func.func @transform_7(%arg0: i32, %arg1: i32) -> (i32, i32) {
    %c0_i32 = arith.constant 0 : i32
    %c0_i32_0 = arith.constant 0 : i32
    %c0_i32_1 = arith.constant 0 : i32
    return %c0_i32, %c0_i32_0 : i32, i32
  }
  func.func @transform_8(%arg0: i32, %arg1: i32) -> (i32, i32, i32) {
    %c0_i32 = arith.constant 0 : i32
    %c0_i32_0 = arith.constant 0 : i32
    return %arg0, %c0_i32, %arg1 : i32, i32, i32
  }
  func.func @transform_9(%arg0: i32, %arg1: i32) -> (i32, i32, i32) {
    %c0_i32 = arith.constant 0 : i32
    %c0_i32_0 = arith.constant 0 : i32
    return %arg0, %c0_i32, %arg1 : i32, i32, i32
  }
  func.func @transform_10(%arg0: i32, %arg1: i32) -> (i32, i32, i32) {
    %c0_i32 = arith.constant 0 : i32
    %c0_i32_0 = arith.constant 0 : i32
    return %arg0, %c0_i32, %arg1 : i32, i32, i32
  }
  func.func @transform_11(%arg0: i32, %arg1: i32) -> (i32, i32, i32) {
    %c0_i32 = arith.constant 0 : i32
    %c0_i32_0 = arith.constant 0 : i32
    return %arg0, %c0_i32, %arg1 : i32, i32, i32
  }
}

</mosaic_0001>

<llo_original>
// kernel: tpu_custom_call.1
$region0: #{tpu_custom_call.1}
  #allocation0 [shape = 'u32[]', space=smem, size = 0x4, offset = 0x4, fixed_abs, tag = 'smem constant byte address 0x4 - core index']
  #allocation1 [shape = 'u32[72,128]{1,0:T(1,128)}', space=vmem, size = 0x9000, scoped, tag = 'internal scratch']
  %s0 = inlined_call_operand.vmem [shape: f32[2,32,16], index: 0, kind: input, shape index: {}]
  %s1 = inlined_call_operand.vmem [shape: f32[8,32], index: 1, kind: input, shape index: {}]
  %s2 = inlined_call_operand.vmem [shape: f32[8,1], index: 2, kind: input, shape index: {}]
  %s3 = inlined_call_operand.vmem [shape: f32[16,8], index: 3, kind: input, shape index: {}]
  %s4 = inlined_call_operand.vmem [shape: f32[16,1], index: 4, kind: input, shape index: {}]
  %s5 = inlined_call_operand.vmem [shape: f32[8,16], index: 5, kind: input, shape index: {}]
  %s6 = inlined_call_operand.vmem [shape: f32[32,8], index: 6, kind: input, shape index: {}]
  %s7 = inlined_call_operand.vmem [shape: f32[32,1], index: 7, kind: input, shape index: {}]
  %s8 = inlined_call_operand.vmem [shape: f32[2,32,16], index: 8, kind: output, shape index: {0}]
  %s9 = inlined_call_operand.hbm [shape: f32[2,8,16], index: 9, kind: output, shape index: {1}]
  %s10 = inlined_call_operand.hbm [shape: s32[2,1,16], index: 10, kind: output, shape index: {2}]
  %s11 = inlined_call_operand.hbm [shape: f32[2,1,16], index: 11, kind: output, shape index: {3}]
  %12 = xla_tuple %s8, %s9, %s10, %s11
  %s13 = sld [smem:[#allocation0]]
  $region89: #{tpu_custom_call.1} parent=0
    _
  %s15 = ssub.s32 1, %s13
  %s16 = scalar_select 0, %s15, %s13
  $region1: #{tpu_custom_call.1} parent=0
    #allocation2 [shape = 'u8[8192]{0}', space=vmem, size = 0x2000, scoped, tag = 'output window, operand 1']
    #allocation3 [shape = 's32[2]{0}', space=sflag, size = 0x8, scoped, tag = 'scoped memory for tpu_custom_call.1']
    #allocation4 [shape = 'u8[1024]{0}', space=vmem, size = 0x400, scoped, tag = 'output window, operand 2']
    #allocation5 [shape = 's32[2]{0}', space=sflag, size = 0x8, scoped, tag = 'scoped memory for tpu_custom_call.1']
    #allocation6 [shape = 'u8[1024]{0}', space=vmem, size = 0x400, scoped, tag = 'output window, operand 3']
    %17 = vsyncpa [#allocation3], 0
    %s18 = scalar_lea.sflag [#allocation3], 1
    %19 = vsyncpa %s18, 0
    %20 = vsyncpa [#allocation5], 0
    %s21 = scalar_lea.sflag [#allocation5], 1
    %22 = vsyncpa %s21, 0
    loop: start=0, step=1, limit=4
    $region2: #{tpu_custom_call.1} parent=1 // loop_pre_header
      _
    $region3: #{tpu_custom_call.1} parent=1 // loop_header
      %s24 = sphi 0, %s28
      %p25 = scmp.ge.s32.totalorder %s24, 4
      %s31 = sphi 0, %s43
      %s32 = sphi 0, %s39
      %s33 = sphi 0, %s31
      %s34 = sphi 0, %s32
      %s35 = sphi 0, %s33
      %s36 = sphi 0, %s34
      %s48 = sphi 0, %s50
      %s51 = sphi 0, %s48
      %s52 = sphi 0, %s51
      %s68 = sphi 0, %s52
      %s72 = sphi 0, %s72
      %s74 = sphi 0, %s72
      %s75 = sphi 0, %s74
      %s89 = sphi 0, %s75
      %s93 = sphi 0, %s93
      %s95 = sphi 0, %s93
      %s96 = sphi 0, %s95
      %s110 = sphi 0, %s96
      %s114 = sphi 0, %s114
      %s116 = sphi 0, %s114
      %s117 = sphi 0, %s116
      %s131 = sphi 0, %s117
      %s135 = sphi 0, %s135
      %s137 = sphi 0, %s135
      %s138 = sphi 0, %s137
      %s152 = sphi 0, %s138
      %s156 = sphi 0, %s156
      %s158 = sphi 0, %s156
      %s159 = sphi 0, %s158
      %s173 = sphi 0, %s159
      %s177 = sphi 0, %s177
      %s179 = sphi 0, %s177
      %s180 = sphi 0, %s179
      %s194 = sphi 0, %s180
      %s198 = sphi 0, %s198
      %s200 = sphi 0, %s198
      %s201 = sphi 0, %s200
      %s215 = sphi 0, %s201
      %s223 = sphi 0, %s225
      %s226 = sphi 0, %s223
      %s227 = sphi 0, %s226
      %s243 = sphi 0, %s227
      %s251 = sphi 0, %s253
      %s254 = sphi 0, %s251
      %s255 = sphi 0, %s254
      %s271 = sphi 0, %s255
      %s279 = sphi 0, %s281
      %s282 = sphi 0, %s279
      %s283 = sphi 0, %s282
      %s299 = sphi 0, %s283
      %s307 = sphi 0, %s309
      %s310 = sphi 0, %s307
      %s311 = sphi 0, %s310
      %s327 = sphi 0, %s311
    $region4: #{tpu_custom_call.1} parent=1 // loop_header_branch
      %27 = sbr.rel (%p25) target = $region8
    $region5: #{tpu_custom_call.1} parent=1 // loop_body
      %s29 = ssub.s32 %s24, 1
      %s30 = ssub.s32 %s24, 2
      %s37 = sadd.s32 1, %s32
      %p38 = scmp.ge.s32.totalorder %s37, 1
      %s39 = scalar_select %p38, 0, %s37
      %s40 = sadd.s32 1, %s31
      %s41 = scalar_select %p38, %s40, %s31
      %p42 = scmp.ge.s32.totalorder %s41, 2
      %s43 = scalar_select %p42, 0, %s41
      %s44 = ssub.s32 %s31, %s43
      %s45 = ssub.s32 %s32, %s39
      %s46 = sor.u32 %s44, %s45
      %p47 = scmp.eq.s32.totalorder %s46, 0
      %s49 = sadd.s32 %s48, 1
      %s50 = scalar_select %p47, %s48, %s49
      %p53 = pneg %p47
      %p54 = scmp.eq.s32.totalorder %s24, 1
      %p55 = por %p53, %p54
      %p56 = scmp.ne.s32.totalorder %s48, %s51
      %p57 = scmp.eq.s32.totalorder %s24, 0
      %p58 = por %p56, %p57
      %p59 = scmp.ne.s32.totalorder %s48, %s51
      %p60 = scmp.eq.s32.totalorder %s29, 1
      %p61 = por %p59, %p60
      %p62 = scmp.ne.s32.totalorder %s51, %s52
      %p63 = scmp.eq.s32.totalorder %s29, 0
      %p64 = por %p62, %p63
      %p65 = scmp.ne.s32.totalorder %s51, %s52
      %p66 = scmp.eq.s32.totalorder %s30, 1
      %p67 = por %p65, %p66
      %p69 = scmp.ne.s32.totalorder %s52, %s68
      %p70 = scmp.eq.s32.totalorder %s30, 0
      %p71 = por %p69, %p70
      %s73 = sadd.s32 %s72, 1
      %p76 = scmp.eq.s32.totalorder %s24, 1
      %p77 = scmp.ne.s32.totalorder %s72, %s74
      %p78 = scmp.eq.s32.totalorder %s24, 0
      %p79 = por %p77, %p78
      %p80 = scmp.ne.s32.totalorder %s72, %s74
      %p81 = scmp.eq.s32.totalorder %s29, 1
      %p82 = por %p80, %p81
      %p83 = scmp.ne.s32.totalorder %s74, %s75
      %p84 = scmp.eq.s32.totalorder %s29, 0
      %p85 = por %p83, %p84
      %p86 = scmp.ne.s32.totalorder %s74, %s75
      %p87 = scmp.eq.s32.totalorder %s30, 1
      %p88 = por %p86, %p87
      %p90 = scmp.ne.s32.totalorder %s75, %s89
      %p91 = scmp.eq.s32.totalorder %s30, 0
      %p92 = por %p90, %p91
      %s94 = sadd.s32 %s93, 1
      %p97 = scmp.eq.s32.totalorder %s24, 1
      %p98 = scmp.ne.s32.totalorder %s93, %s95
      %p99 = scmp.eq.s32.totalorder %s24, 0
      %p100 = por %p98, %p99
      %p101 = scmp.ne.s32.totalorder %s93, %s95
      %p102 = scmp.eq.s32.totalorder %s29, 1
      %p103 = por %p101, %p102
      %p104 = scmp.ne.s32.totalorder %s95, %s96
      %p105 = scmp.eq.s32.totalorder %s29, 0
      %p106 = por %p104, %p105
      %p107 = scmp.ne.s32.totalorder %s95, %s96
      %p108 = scmp.eq.s32.totalorder %s30, 1
      %p109 = por %p107, %p108
      %p111 = scmp.ne.s32.totalorder %s96, %s110
      %p112 = scmp.eq.s32.totalorder %s30, 0
      %p113 = por %p111, %p112
      %s115 = sadd.s32 %s114, 1
      %p118 = scmp.eq.s32.totalorder %s24, 1
      %p119 = scmp.ne.s32.totalorder %s114, %s116
      %p120 = scmp.eq.s32.totalorder %s24, 0
      %p121 = por %p119, %p120
      %p122 = scmp.ne.s32.totalorder %s114, %s116
      %p123 = scmp.eq.s32.totalorder %s29, 1
      %p124 = por %p122, %p123
      %p125 = scmp.ne.s32.totalorder %s116, %s117
      %p126 = scmp.eq.s32.totalorder %s29, 0
      %p127 = por %p125, %p126
      %p128 = scmp.ne.s32.totalorder %s116, %s117
      %p129 = scmp.eq.s32.totalorder %s30, 1
      %p130 = por %p128, %p129
      %p132 = scmp.ne.s32.totalorder %s117, %s131
      %p133 = scmp.eq.s32.totalorder %s30, 0
      %p134 = por %p132, %p133
      %s136 = sadd.s32 %s135, 1
      %p139 = scmp.eq.s32.totalorder %s24, 1
      %p140 = scmp.ne.s32.totalorder %s135, %s137
      %p141 = scmp.eq.s32.totalorder %s24, 0
      %p142 = por %p140, %p141
      %p143 = scmp.ne.s32.totalorder %s135, %s137
      %p144 = scmp.eq.s32.totalorder %s29, 1
      %p145 = por %p143, %p144
      %p146 = scmp.ne.s32.totalorder %s137, %s138
      %p147 = scmp.eq.s32.totalorder %s29, 0
      %p148 = por %p146, %p147
      %p149 = scmp.ne.s32.totalorder %s137, %s138
      %p150 = scmp.eq.s32.totalorder %s30, 1
      %p151 = por %p149, %p150
      %p153 = scmp.ne.s32.totalorder %s138, %s152
      %p154 = scmp.eq.s32.totalorder %s30, 0
      %p155 = por %p153, %p154
      %s157 = sadd.s32 %s156, 1
      %p160 = scmp.eq.s32.totalorder %s24, 1
      %p161 = scmp.ne.s32.totalorder %s156, %s158
      %p162 = scmp.eq.s32.totalorder %s24, 0
      %p163 = por %p161, %p162
      %p164 = scmp.ne.s32.totalorder %s156, %s158
      %p165 = scmp.eq.s32.totalorder %s29, 1
      %p166 = por %p164, %p165
      %p167 = scmp.ne.s32.totalorder %s158, %s159
      %p168 = scmp.eq.s32.totalorder %s29, 0
      %p169 = por %p167, %p168
      %p170 = scmp.ne.s32.totalorder %s158, %s159
      %p171 = scmp.eq.s32.totalorder %s30, 1
      %p172 = por %p170, %p171
      %p174 = scmp.ne.s32.totalorder %s159, %s173
      %p175 = scmp.eq.s32.totalorder %s30, 0
      %p176 = por %p174, %p175
      %s178 = sadd.s32 %s177, 1
      %p181 = scmp.eq.s32.totalorder %s24, 1
      %p182 = scmp.ne.s32.totalorder %s177, %s179
      %p183 = scmp.eq.s32.totalorder %s24, 0
      %p184 = por %p182, %p183
      %p185 = scmp.ne.s32.totalorder %s177, %s179
      %p186 = scmp.eq.s32.totalorder %s29, 1
      %p187 = por %p185, %p186
      %p188 = scmp.ne.s32.totalorder %s179, %s180
      %p189 = scmp.eq.s32.totalorder %s29, 0
      %p190 = por %p188, %p189
      %p191 = scmp.ne.s32.totalorder %s179, %s180
      %p192 = scmp.eq.s32.totalorder %s30, 1
      %p193 = por %p191, %p192
      %p195 = scmp.ne.s32.totalorder %s180, %s194
      %p196 = scmp.eq.s32.totalorder %s30, 0
      %p197 = por %p195, %p196
      %s199 = sadd.s32 %s198, 1
      %p202 = scmp.eq.s32.totalorder %s24, 1
      %p203 = scmp.ne.s32.totalorder %s198, %s200
      %p204 = scmp.eq.s32.totalorder %s24, 0
      %p205 = por %p203, %p204
      %p206 = scmp.ne.s32.totalorder %s198, %s200
      %p207 = scmp.eq.s32.totalorder %s29, 1
      %p208 = por %p206, %p207
      %p209 = scmp.ne.s32.totalorder %s200, %s201
      %p210 = scmp.eq.s32.totalorder %s29, 0
      %p211 = por %p209, %p210
      %p212 = scmp.ne.s32.totalorder %s200, %s201
      %p213 = scmp.eq.s32.totalorder %s30, 1
      %p214 = por %p212, %p213
      %p216 = scmp.ne.s32.totalorder %s201, %s215
      %p217 = scmp.eq.s32.totalorder %s30, 0
      %p218 = por %p216, %p217
      %s219 = ssub.s32 %s31, %s43
      %s220 = ssub.s32 %s32, %s39
      %s221 = sor.u32 %s219, %s220
      %p222 = scmp.eq.s32.totalorder %s221, 0
      %s224 = sadd.s32 %s223, 1
      %s225 = scalar_select %p222, %s223, %s224
      %p228 = pneg %p222
      %p229 = scmp.eq.s32.totalorder %s24, 1
      %p230 = por %p228, %p229
      %p231 = scmp.ne.s32.totalorder %s223, %s226
      %p232 = scmp.eq.s32.totalorder %s24, 0
      %p233 = por %p231, %p232
      %p234 = scmp.ne.s32.totalorder %s223, %s226
      %p235 = scmp.eq.s32.totalorder %s29, 1
      %p236 = por %p234, %p235
      %p237 = scmp.ne.s32.totalorder %s226, %s227
      %p238 = scmp.eq.s32.totalorder %s29, 0
      %p239 = por %p237, %p238
      %p240 = scmp.ne.s32.totalorder %s226, %s227
      %p241 = scmp.eq.s32.totalorder %s30, 1
      %p242 = por %p240, %p241
      %p244 = scmp.ne.s32.totalorder %s227, %s243
      %p245 = scmp.eq.s32.totalorder %s30, 0
      %p246 = por %p244, %p245
      %s247 = ssub.s32 %s31, %s43
      %s248 = ssub.s32 %s32, %s39
      %s249 = sor.u32 %s247, %s248
      %p250 = scmp.eq.s32.totalorder %s249, 0
      %s252 = sadd.s32 %s251, 1
      %s253 = scalar_select %p250, %s251, %s252
      %p256 = pneg %p250
      %p257 = scmp.eq.s32.totalorder %s24, 1
      %p258 = por %p256, %p257
      %p259 = scmp.ne.s32.totalorder %s251, %s254
      %p260 = scmp.eq.s32.totalorder %s24, 0
      %p261 = por %p259, %p260
      %p262 = scmp.ne.s32.totalorder %s251, %s254
      %p263 = scmp.eq.s32.totalorder %s29, 1
      %p264 = por %p262, %p263
      %p265 = scmp.ne.s32.totalorder %s254, %s255
      %p266 = scmp.eq.s32.totalorder %s29, 0
      %p267 = por %p265, %p266
      %p268 = scmp.ne.s32.totalorder %s254, %s255
      %p269 = scmp.eq.s32.totalorder %s30, 1
      %p270 = por %p268, %p269
      %p272 = scmp.ne.s32.totalorder %s255, %s271
      %p273 = scmp.eq.s32.totalorder %s30, 0
      %p274 = por %p272, %p273
      %s275 = ssub.s32 %s31, %s43
      %s276 = ssub.s32 %s32, %s39
      %s277 = sor.u32 %s275, %s276
      %p278 = scmp.eq.s32.totalorder %s277, 0
      %s280 = sadd.s32 %s279, 1
      %s281 = scalar_select %p278, %s279, %s280
      %p284 = pneg %p278
      %p285 = scmp.eq.s32.totalorder %s24, 1
      %p286 = por %p284, %p285
      %p287 = scmp.ne.s32.totalorder %s279, %s282
      %p288 = scmp.eq.s32.totalorder %s24, 0
      %p289 = por %p287, %p288
      %p290 = scmp.ne.s32.totalorder %s279, %s282
      %p291 = scmp.eq.s32.totalorder %s29, 1
      %p292 = por %p290, %p291
      %p293 = scmp.ne.s32.totalorder %s282, %s283
      %p294 = scmp.eq.s32.totalorder %s29, 0
      %p295 = por %p293, %p294
      %p296 = scmp.ne.s32.totalorder %s282, %s283
      %p297 = scmp.eq.s32.totalorder %s30, 1
      %p298 = por %p296, %p297
      %p300 = scmp.ne.s32.totalorder %s283, %s299
      %p301 = scmp.eq.s32.totalorder %s30, 0
      %p302 = por %p300, %p301
      %s303 = ssub.s32 %s31, %s43
      %s304 = ssub.s32 %s32, %s39
      %s305 = sor.u32 %s303, %s304
      %p306 = scmp.eq.s32.totalorder %s305, 0
      %s308 = sadd.s32 %s307, 1
      %s309 = scalar_select %p306, %s307, %s308
      %p312 = pneg %p306
      %p313 = scmp.eq.s32.totalorder %s24, 1
      %p314 = por %p312, %p313
      %p315 = scmp.ne.s32.totalorder %s307, %s310
      %p316 = scmp.eq.s32.totalorder %s24, 0
      %p317 = por %p315, %p316
      %p318 = scmp.ne.s32.totalorder %s307, %s310
      %p319 = scmp.eq.s32.totalorder %s29, 1
      %p320 = por %p318, %p319
      %p321 = scmp.ne.s32.totalorder %s310, %s311
      %p322 = scmp.eq.s32.totalorder %s29, 0
      %p323 = por %p321, %p322
      %p324 = scmp.ne.s32.totalorder %s310, %s311
      %p325 = scmp.eq.s32.totalorder %s30, 1
      %p326 = por %p324, %p325
      %p328 = scmp.ne.s32.totalorder %s311, %s327
      %p329 = scmp.eq.s32.totalorder %s30, 0
      %p330 = por %p328, %p329
      %p331 = scmp.le.s32.totalorder 1, %s24
      %p332 = scmp.lt.s32.totalorder %s24, 3
      %p333 = pnand %p331, %p332
      %p334 = pneg %p333
      // Predicated region
      $region9: #{tpu_custom_call.1} parent=5 // pred_check
        _
      $region10: #{tpu_custom_call.1} parent=5 // pred_check_branch
        %336 = sbr.rel (%p333) target = $region12
      $region11: #{tpu_custom_call.1} parent=5 // pred_region
        %s337 = ssub.s32 %s24, 1
        // Predicated region
        $region13: #{tpu_custom_call.1} parent=11 // pred_check
          %p338 = pneg %p85
        $region14: #{tpu_custom_call.1} parent=11 // pred_check_branch
          %340 = sbr.rel (%p338) target = $region16
        $region15: #{tpu_custom_call.1} parent=11 // pred_region
          _
        $region16: #{tpu_custom_call.1} parent=11 // pred_fallthru
          _
        // Predicated region
        $region17: #{tpu_custom_call.1} parent=11 // pred_check
          %p341 = pneg %p106
        $region18: #{tpu_custom_call.1} parent=11 // pred_check_branch
          %343 = sbr.rel (%p341) target = $region20
        $region19: #{tpu_custom_call.1} parent=11 // pred_region
          _
        $region20: #{tpu_custom_call.1} parent=11 // pred_fallthru
          _
        // Predicated region
        $region21: #{tpu_custom_call.1} parent=11 // pred_check
          %p344 = pneg %p127
        $region22: #{tpu_custom_call.1} parent=11 // pred_check_branch
          %346 = sbr.rel (%p344) target = $region24
        $region23: #{tpu_custom_call.1} parent=11 // pred_region
          _
        $region24: #{tpu_custom_call.1} parent=11 // pred_fallthru
          _
        // Predicated region
        $region25: #{tpu_custom_call.1} parent=11 // pred_check
          %p347 = pneg %p148
        $region26: #{tpu_custom_call.1} parent=11 // pred_check_branch
          %349 = sbr.rel (%p347) target = $region28
        $region27: #{tpu_custom_call.1} parent=11 // pred_region
          _
        $region28: #{tpu_custom_call.1} parent=11 // pred_fallthru
          _
        // Predicated region
        $region29: #{tpu_custom_call.1} parent=11 // pred_check
          %p350 = pneg %p169
        $region30: #{tpu_custom_call.1} parent=11 // pred_check_branch
          %352 = sbr.rel (%p350) target = $region32
        $region31: #{tpu_custom_call.1} parent=11 // pred_region
          _
        $region32: #{tpu_custom_call.1} parent=11 // pred_fallthru
          _
        // Predicated region
        $region33: #{tpu_custom_call.1} parent=11 // pred_check
          %p353 = pneg %p190
        $region34: #{tpu_custom_call.1} parent=11 // pred_check_branch
          %355 = sbr.rel (%p353) target = $region36
        $region35: #{tpu_custom_call.1} parent=11 // pred_region
          _
        $region36: #{tpu_custom_call.1} parent=11 // pred_fallthru
          _
        // Predicated region
        $region37: #{tpu_custom_call.1} parent=11 // pred_check
          %p356 = pneg %p211
        $region38: #{tpu_custom_call.1} parent=11 // pred_check_branch
          %358 = sbr.rel (%p356) target = $region40
        $region39: #{tpu_custom_call.1} parent=11 // pred_region
          _
        $region40: #{tpu_custom_call.1} parent=11 // pred_fallthru
          _
      $region12: #{tpu_custom_call.1} parent=5 // pred_fallthru
        _
      %p359 = scmp.lt.s32.totalorder %s24, 2
      // Predicated region
      $region41: #{tpu_custom_call.1} parent=5 // pred_check
        %p360 = pneg %p359
      $region42: #{tpu_custom_call.1} parent=5 // pred_check_branch
        %362 = sbr.rel (%p360) target = $region44
      $region43: #{tpu_custom_call.1} parent=5 // pred_region
        // Predicated region
        $region45: #{tpu_custom_call.1} parent=43 // pred_check
          %p363 = pneg %p58
        $region46: #{tpu_custom_call.1} parent=43 // pred_check_branch
          %365 = sbr.rel (%p363) target = $region48
        $region47: #{tpu_custom_call.1} parent=43 // pred_region
          %p366 = scmp.lt.s32.totalorder %s31, 1
          %s367 = scalar_select %p366, %s31, 1
          %p368 = scmp.lt.s32.totalorder %s32, 0
          %s369 = scalar_select %p368, %s32, 0
          %s370 = smul.addr %s367, 4
          %s371 = sadd.s32 %s369, %s370
          %s372 = smul.addr %s371, 8
          %s373 = scalar_lea.vmem %s0, %s372
        $region48: #{tpu_custom_call.1} parent=43 // pred_fallthru
          _
      $region44: #{tpu_custom_call.1} parent=5 // pred_fallthru
        _
      %p374 = scmp.le.s32.totalorder 1, %s24
      %p375 = scmp.lt.s32.totalorder %s24, 3
      %p376 = pnand %p374, %p375
      %p377 = pneg %p376
      // Predicated region
      $region49: #{tpu_custom_call.1} parent=5 // pred_check
        _
      $region50: #{tpu_custom_call.1} parent=5 // pred_check_branch
        %379 = sbr.rel (%p376) target = $region52
      $region51: #{tpu_custom_call.1} parent=5 // pred_region
        %s380 = ssub.s32 %s24, 1
        %p381 = scmp.lt.s32.totalorder %s33, 1
        %s382 = scalar_select %p381, %s33, 1
        %p383 = scmp.lt.s32.totalorder %s34, 0
        %s384 = scalar_select %p383, %s34, 0
        %s385 = smul.addr %s382, 4
        %s386 = sadd.s32 %s384, %s385
        %s387 = smul.addr %s386, 8
        %s388 = scalar_lea.vmem %s0, %s387
        %p389 = pneg %p64
        %p390 = pneg %p61
        %p391 = pneg %p85
        %p392 = pneg %p82
        %p393 = pneg %p106
        %p394 = pneg %p103
        %p395 = pneg %p127
        %p396 = pneg %p124
        %p397 = pneg %p148
        %p398 = pneg %p145
        %p399 = pneg %p169
        %p400 = pneg %p166
        %p401 = pneg %p190
        %p402 = pneg %p187
        %p403 = pneg %p211
        %p404 = pneg %p208
        %p405 = pneg %p239
        %p406 = pneg %p236
        %p407 = scmp.lt.s32.totalorder %s33, 1
        %s408 = scalar_select %p407, %s33, 1
        %p409 = scmp.lt.s32.totalorder %s34, 0
        %s410 = scalar_select %p409, %s34, 0
        %s411 = smul.addr %s408, 4
        %s412 = sadd.s32 %s410, %s411
        %s413 = smul.addr %s412, 8
        %s414 = scalar_lea.vmem %s8, %s413
        %p415 = pneg %p267
        %p416 = pneg %p264
        %s417 = sand.u32 %s254, 1
        %s418 = scalar_lea.sflag [#allocation3], %s417
        %s419 = sand.u32 %s254, 1
        %s420 = smul.addr %s419, 8
        %s421 = scalar_lea.vmem [#allocation2], %s420
        %p422 = pneg %p295
        %p423 = pneg %p292
        %s424 = sand.u32 %s29, 1
        %s425 = scalar_lea.sflag [#allocation5], %s424
        %s426 = sand.u32 %s282, 1
        %s427 = scalar_lea.vmem [#allocation4], %s426
        %p428 = pneg %p323
        %p429 = pneg %p320
        %s430 = sand.u32 %s29, 1
        %s431 = scalar_lea.sflag [#allocation5], %s430
        %s432 = sand.u32 %s310, 1
        %s433 = scalar_lea.vmem [#allocation6], %s432
        %p434 = scmp.lt.s32.totalorder %s33, 1
        %s435 = scalar_select %p434, %s33, 1
        %p436 = scmp.lt.s32.totalorder %s34, 0
        %s437 = scalar_select %p436, %s34, 0
        %s438 = smul.addr %s435, 4
        %s439 = sadd.s32 %s437, %s438
        %s440 = smul.addr %s439, 8
        %s441 = scalar_lea.vmem %s0, %s440
        %p442 = scmp.lt.s32.totalorder %s33, 1
        %s443 = scalar_select %p442, %s33, 1
        %p444 = scmp.lt.s32.totalorder %s34, 0
        %s445 = scalar_select %p444, %s34, 0
        %s446 = smul.addr %s443, 4
        %s447 = sadd.s32 %s445, %s446
        %s448 = smul.addr %s447, 8
        %s449 = scalar_lea.vmem %s8, %s448
        %v450 = vld [vmem:[%s441] sm:$0xff]
        %v451 = vld [vmem:[%s441 + $0x8] sm:$0xff]
        %v452 = vld [vmem:[%s441 + $0x10] sm:$0xff]
        %v453 = vld [vmem:[%s441 + $0x18] sm:$0xff]
        %v454 = vld [vmem:[%s1] sm:$0xff]
        %v455 = vld [vmem:[%s2] sm:$0xff]
        %457 = vset.pattern.permute.xlu0 0
        %458 = vperm.xlu0 %457, %v455
        %v459 = vpop.permute.xlu0 %458
        %vm461 = vcmask 261120
        %v463 = vsel %vm461, %v454, 0
        %465 = vmatpush.msra.mxu0 0.0
        %466 = vmatpush.msra.mxu0 0.0
        %467 = vmatpush.msra.mxu0 0.0
        %468 = vmatpush.msra.mxu0 0.0
        %469 = vmatpush.msra.mxu0 0.0
        %470 = vmatpush.msra.mxu0 0.0
        %471 = vmatpush.msra.mxu0 0.0
        %472 = vmatpush.msra.mxu0 0.0
        %473 = vmatpush.msra.mxu0 0.0
        %474 = vmatpush.msra.mxu0 0.0
        %475 = vmatpush.msra.mxu0 0.0
        %476 = vmatpush.msra.mxu0 0.0
        %477 = vmatpush.msra.mxu0 %v453
        %478 = vmatpush.msra.mxu0 %v452
        %479 = vmatpush.msra.mxu0 %v451
        %480 = vmatpush.msra.mxu0 %v450
        %481 = vmatmul.f32.gmra.mxu0 %v463
        %v482 = vpop.f32.mrf.mxu0
        %v483 = vadd.f32 %v459, %v482
        %484 = vdwg.mxu0
        %vm485 = vcmask 130048
        %486 = vst.msk [vmem:[%s421] sm:$0xff] %vm485, %v483
        %v487 = vmul.f32 %v483, %v483
        %v488 = vsel %vm485, %v487, 0.0
        %v489 = vrot.slane %v488, 4
        %v490 = vadd.f32 %v488, %v489
        %v491 = vrot.slane %v490, 2
        %v492 = vadd.f32 %v490, %v491
        %v493 = vrot.slane %v492, 1
        %v494 = vadd.f32 %v492, %v493
        %v495 = vmax.f32 %v494, 1e-24
        %v496 = vrsqrt.pop %v495
        %v497 = vmul.f32 %v496, %v495
        %v498 = vmul.f32 %v497, %v496
        %v499 = vmul.f32 0.5, %v498
        %v500 = vsub.f32 1.5, %v499
        %v501 = vmul.f32 %v496, %v500
        %vm502 = vweird.f32 %v495
        %vm503 = vweird.f32 %v496
        %vm504 = vmor %vm502, %vm503
        %v505 = vsel %vm504, %v496, %v501
        %v506 = vmul.f32 %v483, %v505
        %v507 = vld [vmem:[%s3] sm:$0xff]
        %v508 = vld [vmem:[%s3 + $0x8] sm:$0xff]
        %v509 = vld [vmem:[%s4] sm:$0xff]
        %v510 = vld [vmem:[%s4 + $0x8] sm:$0xff]
        %512 = vset.pattern.permute.xlu0 0
        %513 = vperm.xlu0 %512, %v509
        %v514 = vpop.permute.xlu0 %513
        %517 = vset.pattern.permute.xlu0 0
        %518 = vperm.xlu0 %517, %v510
        %v519 = vpop.permute.xlu0 %518
        %vm521 = vcmask 64512
        %v523 = vsel %vm521, %v507, 0
        %v526 = vsel %vm521, %v508, 0
        %528 = vmatpush.msra.mxu0 0.0
        %529 = vmatpush.msra.mxu0 0.0
        %530 = vmatpush.msra.mxu0 0.0
        %531 = vmatpush.msra.mxu0 0.0
        %532 = vmatpush.msra.mxu0 0.0
        %533 = vmatpush.msra.mxu0 0.0
        %534 = vmatpush.msra.mxu0 0.0
        %535 = vmatpush.msra.mxu0 0.0
        %536 = vmatpush.msra.mxu0 0.0
        %537 = vmatpush.msra.mxu0 0.0
        %538 = vmatpush.msra.mxu0 0.0
        %539 = vmatpush.msra.mxu0 0.0
        %540 = vmatpush.msra.mxu0 0.0
        %541 = vmatpush.msra.mxu0 0.0
        %542 = vmatpush.msra.mxu0 0.0
        %543 = vmatpush.msra.mxu0 %v506
        %544 = vmatmul.f32.gmra.mxu0 %v523
        %v545 = vpop.f32.mrf.mxu0
        %v546 = vadd.f32 %v514, %v545
        %547 = vmatmul.f32.gmra.mxu0 %v526
        %v548 = vpop.f32.mrf.mxu0
        %v549 = vadd.f32 %v519, %v548
        %550 = vdwg.mxu0
        %v551 = vlaneseq
        %v552 = vshrl.u32 %v551, 7
        %v553 = vadd.s32 %v552, 8
        %v554 = vsel %vm485, %v546, -inf
        %v555 = vsel %vm485, %v549, -inf
        %v556 = vmax.f32 %v554, %v555
        %v557 = vrot.slane %v556, 4
        %v558 = vmax.f32 %v556, %v557
        %v559 = vrot.slane %v558, 2
        %v560 = vmax.f32 %v558, %v559
        %v561 = vrot.slane %v560, 1
        %v562 = vmax.f32 %v560, %v561
        %vm563 = vcmp.eq.f32.partialorder %v546, %v562
        %vm564 = vcmp.eq.f32.partialorder %v549, %v562
        %v565 = vsel %vm563, %v552, 16
        %v566 = vsel %vm564, %v553, 16
        %v567 = vsel %vm485, %v565, 2147483647
        %v568 = vsel %vm485, %v566, 2147483647
        %vm569 = vcmp.lt.s32.totalorder %v567, %v568
        %v570 = vsel %vm569, %v567, %v568
        %v571 = vrot.slane %v570, 4
        %vm572 = vcmp.lt.s32.totalorder %v570, %v571
        %v573 = vsel %vm572, %v570, %v571
        %v574 = vrot.slane %v573, 2
        %vm575 = vcmp.lt.s32.totalorder %v573, %v574
        %v576 = vsel %vm575, %v573, %v574
        %v577 = vrot.slane %v576, 1
        %vm578 = vcmp.lt.s32.totalorder %v576, %v577
        %v579 = vsel %vm578, %v576, %v577
        %vm580 = vcmask 122880
        %581 = vst.msk [vmem:[%s427] sm:$0x1] %vm580, %v579
        %vm582 = vcmp.eq.s32.totalorder %v552, %v579
        %vm583 = vcmp.eq.s32.totalorder %v553, %v579
        %v584 = vsel %vm582, 1, 0
        %v585 = vsel %vm583, 1, 0
        %v586 = vcvt.s32.f32 %v584
        %v587 = vcvt.s32.f32 %v585
        %v588 = vld [vmem:[%s5] sm:$0xff]
        %v590 = vsel %vm485, %v588, 0
        %592 = vmatpush.msra.mxu0 0.0
        %593 = vmatpush.msra.mxu0 0.0
        %594 = vmatpush.msra.mxu0 0.0
        %595 = vmatpush.msra.mxu0 0.0
        %596 = vmatpush.msra.mxu0 0.0
        %597 = vmatpush.msra.mxu0 0.0
        %598 = vmatpush.msra.mxu0 0.0
        %599 = vmatpush.msra.mxu0 0.0
        %600 = vmatpush.msra.mxu0 0.0
        %601 = vmatpush.msra.mxu0 0.0
        %602 = vmatpush.msra.mxu0 0.0
        %603 = vmatpush.msra.mxu0 0.0
        %604 = vmatpush.msra.mxu0 0.0
        %605 = vmatpush.msra.mxu0 0.0
        %606 = vmatpush.msra.mxu0 %v587
        %607 = vmatpush.msra.mxu0 %v586
        %608 = vmatmul.f32.gmra.mxu0 %v590
        %v609 = vpop.f32.mrf.mxu0
        %v610 = vadd.f32 0.0, %v609
        %611 = vdwg.mxu0
        %v612 = vsub.f32 %v483, %v610
        %v613 = vmul.f32 %v612, %v612
        %v614 = vsel %vm485, %v613, 0.0
        %v615 = vrot.slane %v614, 4
        %v616 = vadd.f32 %v614, %v615
        %v617 = vrot.slane %v616, 2
        %v618 = vadd.f32 %v616, %v617
        %v619 = vrot.slane %v618, 1
        %v620 = vadd.f32 %v618, %v619
        %621 = vst.msk [vmem:[%s433] sm:$0x1] %vm580, %v620
        %v622 = vld [vmem:[%s6] sm:$0xff]
        %v623 = vld [vmem:[%s6 + $0x8] sm:$0xff]
        %v624 = vld [vmem:[%s6 + $0x10] sm:$0xff]
        %v625 = vld [vmem:[%s6 + $0x18] sm:$0xff]
        %v626 = vld [vmem:[%s7] sm:$0xff]
        %v627 = vld [vmem:[%s7 + $0x8] sm:$0xff]
        %v628 = vld [vmem:[%s7 + $0x10] sm:$0xff]
        %v629 = vld [vmem:[%s7 + $0x18] sm:$0xff]
        %631 = vset.pattern.permute.xlu0 0
        %632 = vperm.xlu0 %631, %v626
        %v633 = vpop.permute.xlu0 %632
        %636 = vset.pattern.permute.xlu0 0
        %637 = vperm.xlu0 %636, %v627
        %v638 = vpop.permute.xlu0 %637
        %641 = vset.pattern.permute.xlu0 0
        %642 = vperm.xlu0 %641, %v628
        %v643 = vpop.permute.xlu0 %642
        %646 = vset.pattern.permute.xlu0 0
        %647 = vperm.xlu0 %646, %v629
        %v648 = vpop.permute.xlu0 %647
        %v651 = vsel %vm521, %v622, 0
        %v654 = vsel %vm521, %v623, 0
        %v657 = vsel %vm521, %v624, 0
        %v660 = vsel %vm521, %v625, 0
        %662 = vmatpush.msra.mxu0 0.0
        %663 = vmatpush.msra.mxu0 0.0
        %664 = vmatpush.msra.mxu0 0.0
        %665 = vmatpush.msra.mxu0 0.0
        %666 = vmatpush.msra.mxu0 0.0
        %667 = vmatpush.msra.mxu0 0.0
        %668 = vmatpush.msra.mxu0 0.0
        %669 = vmatpush.msra.mxu0 0.0
        %670 = vmatpush.msra.mxu0 0.0
        %671 = vmatpush.msra.mxu0 0.0
        %672 = vmatpush.msra.mxu0 0.0
        %673 = vmatpush.msra.mxu0 0.0
        %674 = vmatpush.msra.mxu0 0.0
        %675 = vmatpush.msra.mxu0 0.0
        %676 = vmatpush.msra.mxu0 0.0
        %677 = vmatpush.msra.mxu0 %v610
        %678 = vmatmul.f32.gmra.mxu0 %v651
        %v679 = vpop.f32.mrf.mxu0
        %v680 = vadd.f32 %v633, %v679
        %681 = vmatmul.f32.gmra.mxu0 %v654
        %v682 = vpop.f32.mrf.mxu0
        %v683 = vadd.f32 %v638, %v682
        %684 = vmatmul.f32.gmra.mxu0 %v657
        %v685 = vpop.f32.mrf.mxu0
        %v686 = vadd.f32 %v643, %v685
        %687 = vmatmul.f32.gmra.mxu0 %v660
        %v688 = vpop.f32.mrf.mxu0
        %v689 = vadd.f32 %v648, %v688
        %690 = vdwg.mxu0
        %691 = vst.msk [vmem:[%s449] sm:$0xff] %vm485, %v680
        %692 = vst.msk [vmem:[%s449 + $0x8] sm:$0xff] %vm485, %v683
        %693 = vst.msk [vmem:[%s449 + $0x10] sm:$0xff] %vm485, %v686
        %694 = vst.msk [vmem:[%s449 + $0x18] sm:$0xff] %vm485, %v689
        %p695 = scmp.lt.s32.totalorder %s33, 1
        %s696 = scalar_select %p695, %s33, 1
        %p697 = scmp.lt.s32.totalorder %s34, 0
        %s698 = scalar_select %p697, %s34, 0
        %s699 = smul.addr %s696, 4
        %s700 = sadd.s32 %s698, %s699
        %s701 = smul.addr %s700, 8
        %s702 = scalar_lea.vmem %s8, %s701
        %s703 = sand.u32 %s254, 1
        %s704 = scalar_lea.sflag [#allocation3], %s703
        %s705 = sand.u32 %s254, 1
        %s706 = smul.addr %s705, 8
        %s707 = scalar_lea.vmem [#allocation2], %s706
        %s708 = sand.u32 %s29, 1
        %s709 = scalar_lea.sflag [#allocation5], %s708
        %s710 = sand.u32 %s282, 1
        %s711 = scalar_lea.vmem [#allocation4], %s710
        %s712 = sand.u32 %s29, 1
        %s713 = scalar_lea.sflag [#allocation5], %s712
        %s714 = sand.u32 %s310, 1
        %s715 = scalar_lea.vmem [#allocation6], %s714
        // Predicated region
        $region53: #{tpu_custom_call.1} parent=51 // pred_check
          %p716 = pneg %p236
        $region54: #{tpu_custom_call.1} parent=51 // pred_check_branch
          %718 = sbr.rel (%p716) target = $region56
        $region55: #{tpu_custom_call.1} parent=51 // pred_region
          _
        $region56: #{tpu_custom_call.1} parent=51 // pred_fallthru
          _
        // Predicated region
        $region57: #{tpu_custom_call.1} parent=51 // pred_check
          %p719 = pneg %p264
        $region58: #{tpu_custom_call.1} parent=51 // pred_check_branch
          %721 = sbr.rel (%p719) target = $region60
        $region59: #{tpu_custom_call.1} parent=51 // pred_region
          %723 = vsyncadd %s704, 0
          %s724 = sadd.s32 %s34, %s33
          %s725 = smul.addr %s724, 8
          %s726 = scalar_lea.hbm %s9, %s725
          %s728 = sshll.u32 %s707, 4
          %s729 = int_to_ptr.vmem [resolvable:$true] %s728
          %s730 = sshll.u32 %s726, 4
          %s731 = int_to_ptr.hbm [resolvable:$true] %s730
          %733 = dma.vmem_to_hbm [thread:$0]  %s729, 128, %s731, %s704
        $region60: #{tpu_custom_call.1} parent=51 // pred_fallthru
          _
        // Predicated region
        $region61: #{tpu_custom_call.1} parent=51 // pred_check
          %p734 = pneg %p292
        $region62: #{tpu_custom_call.1} parent=51 // pred_check_branch
          %736 = sbr.rel (%p734) target = $region64
        $region63: #{tpu_custom_call.1} parent=51 // pred_region
          %738 = vsyncadd %s709, 0
          %s739 = sadd.s32 %s34, %s33
          %s740 = scalar_lea.hbm %s10, %s739
          %s742 = sshll.u32 %s711, 4
          %s743 = int_to_ptr.vmem [resolvable:$true] %s742
          %s744 = sshll.u32 %s740, 4
          %s745 = int_to_ptr.hbm [resolvable:$true] %s744
          %747 = dma.vmem_to_hbm [thread:$0]  %s743, 16, %s745, %s709
        $region64: #{tpu_custom_call.1} parent=51 // pred_fallthru
          _
        // Predicated region
        $region65: #{tpu_custom_call.1} parent=51 // pred_check
          %p748 = pneg %p320
        $region66: #{tpu_custom_call.1} parent=51 // pred_check_branch
          %750 = sbr.rel (%p748) target = $region68
        $region67: #{tpu_custom_call.1} parent=51 // pred_region
          %752 = vsyncadd %s713, 0
          %s753 = sadd.s32 %s34, %s33
          %s754 = scalar_lea.hbm %s11, %s753
          %s756 = sshll.u32 %s715, 4
          %s757 = int_to_ptr.vmem [resolvable:$true] %s756
          %s758 = sshll.u32 %s754, 4
          %s759 = int_to_ptr.hbm [resolvable:$true] %s758
          %761 = dma.vmem_to_hbm [thread:$0]  %s757, 16, %s759, %s713
        $region68: #{tpu_custom_call.1} parent=51 // pred_fallthru
          _
      $region52: #{tpu_custom_call.1} parent=5 // pred_fallthru
        _
      %p762 = scmp.le.s32.totalorder 2, %s24
      // Predicated region
      $region69: #{tpu_custom_call.1} parent=5 // pred_check
        %p763 = pneg %p762
      $region70: #{tpu_custom_call.1} parent=5 // pred_check_branch
        %765 = sbr.rel (%p763) target = $region72
      $region71: #{tpu_custom_call.1} parent=5 // pred_region
        %s766 = ssub.s32 %s24, 2
        // Predicated region
        $region73: #{tpu_custom_call.1} parent=71 // pred_check
          %p767 = pneg %p242
        $region74: #{tpu_custom_call.1} parent=71 // pred_check_branch
          %769 = sbr.rel (%p767) target = $region76
        $region75: #{tpu_custom_call.1} parent=71 // pred_region
          %p770 = scmp.lt.s32.totalorder %s35, 1
          %s771 = scalar_select %p770, %s35, 1
          %p772 = scmp.lt.s32.totalorder %s36, 0
          %s773 = scalar_select %p772, %s36, 0
          %s774 = smul.addr %s771, 4
          %s775 = sadd.s32 %s773, %s774
          %s776 = smul.addr %s775, 8
          %s777 = scalar_lea.vmem %s8, %s776
        $region76: #{tpu_custom_call.1} parent=71 // pred_fallthru
          _
        // Predicated region
        $region77: #{tpu_custom_call.1} parent=71 // pred_check
          %p778 = pneg %p270
        $region78: #{tpu_custom_call.1} parent=71 // pred_check_branch
          %780 = sbr.rel (%p778) target = $region80
        $region79: #{tpu_custom_call.1} parent=71 // pred_region
          %s781 = sand.u32 %s255, 1
          %s782 = scalar_lea.sflag [#allocation3], %s781
          %s783 = sand.u32 %s255, 1
          %s784 = smul.addr %s783, 8
          %s785 = scalar_lea.vmem [#allocation2], %s784
          %787 = dma.done %s782, 128
        $region80: #{tpu_custom_call.1} parent=71 // pred_fallthru
          _
        // Predicated region
        $region81: #{tpu_custom_call.1} parent=71 // pred_check
          %p788 = pneg %p298
        $region82: #{tpu_custom_call.1} parent=71 // pred_check_branch
          %790 = sbr.rel (%p788) target = $region84
        $region83: #{tpu_custom_call.1} parent=71 // pred_region
          %s791 = sand.u32 %s30, 1
          %s792 = scalar_lea.sflag [#allocation5], %s791
          %s793 = sand.u32 %s283, 1
          %s794 = scalar_lea.vmem [#allocation4], %s793
          %796 = dma.done %s792, 16
        $region84: #{tpu_custom_call.1} parent=71 // pred_fallthru
          _
        // Predicated region
        $region85: #{tpu_custom_call.1} parent=71 // pred_check
          %p797 = pneg %p326
        $region86: #{tpu_custom_call.1} parent=71 // pred_check_branch
          %799 = sbr.rel (%p797) target = $region88
        $region87: #{tpu_custom_call.1} parent=71 // pred_region
          %s800 = sand.u32 %s30, 1
          %s801 = scalar_lea.sflag [#allocation5], %s800
          %s802 = sand.u32 %s311, 1
          %s803 = scalar_lea.vmem [#allocation6], %s802
          %805 = dma.done %s801, 16
        $region88: #{tpu_custom_call.1} parent=71 // pred_fallthru
          _
      $region72: #{tpu_custom_call.1} parent=5 // pred_fallthru
        _
    $region6: #{tpu_custom_call.1} parent=1 // loop_footer
      %s28 = sadd.s32 1, %s24
    $region7: #{tpu_custom_call.1} parent=1 // loop_footer_branch
      %23 = sbr.rel target = $region3
    $region8: #{tpu_custom_call.1} parent=1 // loop_exit
      _
    %806 = vsyncpa [#allocation3], 1
    %s807 = scalar_lea.sflag [#allocation3], 1
    %808 = vsyncpa %s807, 1
    %809 = vsyncpa [#allocation5], 1
    %s810 = scalar_lea.sflag [#allocation5], 1
    %811 = vsyncpa %s810, 1

</llo_original>
